<compile_context>
chip_gen: v5e
topology: v5e:2x2
jax: 0.10.0
libtpu: 0.0.40
codegen_flags: <defaults>
</compile_context>

<pallas_src>
import functools

import jax
import jax.numpy as jnp
from jax.experimental import pallas as pl
from jax.experimental.pallas import tpu as pltpu

LANES = 128
SUBLANES = 8


def _round_up(x, m):
    return (x + m - 1) // m * m


def _invmae_kernel(pred_ref, target_ref, sum_ref, cnt_ref, *,
                   rows_total, tile_rows, inner_steps, needs_mask):
    c = pl.program_id(0)          # parallel split (maps to cores on v7x)
    i = pl.program_id(1)          # reduction steps within the split

    @pl.when(i == 0)
    def _():
        sum_ref[...] = jnp.zeros_like(sum_ref)
        cnt_ref[...] = jnp.zeros_like(cnt_ref)

    # Cast after the (native-width) VMEM load so HBM traffic stays at the
    # input dtype's width (no-op for f32 inputs).
    t = target_ref[...].astype(jnp.float32)
    p = pred_ref[...].astype(jnp.float32)

    valid = t > 0.0
    if needs_mask:
        # Mask rows past the end of the real data. Covers both the ragged
        # final block and the clamped duplicate block of the parallel split.
        block_idx = c * inner_steps + i
        row_ids = jax.lax.broadcasted_iota(jnp.int32, t.shape, 0)
        valid = jnp.logical_and(
            valid, row_ids + block_idx * tile_rows < rows_total)

    # |1/p - 1/t| == |t - p| / |p * t|  -> a single f32 divide per element.
    # The masked-out / garbage regions never reach the divide denominator.
    denom = jnp.abs(jnp.where(valid, p * t, 1.0))
    err = jnp.where(valid, jnp.abs(t - p) / denom, 0.0)

    # Per-lane partial sums: mostly elementwise vreg adds, one sublane
    # reduction per step; the 128-lane reduce happens once in the wrapper.
    sum_ref[...] += jnp.sum(err, axis=0, keepdims=True)[None]
    cnt_ref[...] += jnp.sum(valid.astype(jnp.float32), axis=0,
                            keepdims=True)[None]


@functools.partial(jax.jit, static_argnames=("tile_rows", "num_splits"))
def inv_mae(pred, target, *, tile_rows=2048, num_splits=2):
    """Matches InvMAE.forward: returns -1.0 if fewer than 10 valid pixels,
    otherwise mean(|1/pred - 1/target|) over pixels where target > 0."""
    n = pred.size
    if n == 0:
        return jnp.float32(-1.0)

    pred_f = pred.reshape(-1)
    target_f = target.reshape(-1)

    # Only pad to the next multiple of 128 lanes if strictly necessary (real
    # depth maps are virtually always lane-divisible, so this copy is skipped).
    rem = n % LANES
    if rem:
        pad = LANES - rem
        pred_f = jnp.concatenate([pred_f, jnp.ones((pad,), pred_f.dtype)])
        target_f = jnp.concatenate([target_f, jnp.zeros((pad,), target_f.dtype)])

    rows_total = pred_f.shape[0] // LANES
    pred2d = pred_f.reshape(rows_total, LANES)
    target2d = target_f.reshape(rows_total, LANES)

    # Block sizing: full array if it is small, otherwise an (8,128)-aligned
    # big streaming tile (2048 rows * 128 lanes * 4 B = 1 MiB per input tile).
    if rows_total <= tile_rows:
        tr = rows_total
    else:
        tr = _round_up(tile_rows, SUBLANES)

    num_blocks = pl.cdiv(rows_total, tr)
    inner = pl.cdiv(num_blocks, num_splits)
    # Mask needed if the last block is ragged or the parallel split introduces
    # a (clamped) duplicate block.
    needs_mask = (inner * num_splits * tr) != rows_total

    kernel = functools.partial(
        _invmae_kernel,
        rows_total=rows_total, tile_rows=tr,
        inner_steps=inner, needs_mask=needs_mask)

    def in_map(c, i):
        blk = c * inner + i
        # Clamp so an over-covering split never DMAs out of bounds; the
        # in-kernel row mask zeroes any duplicated contribution.
        return (jnp.minimum(blk, num_blocks - 1), 0)

    sum_out, cnt_out = pl.pallas_call(
        kernel,
        out_shape=(
            jax.ShapeDtypeStruct((num_splits, 1, LANES), jnp.float32),
            jax.ShapeDtypeStruct((num_splits, 1, LANES), jnp.float32),
        ),
        grid_spec=pltpu.PrefetchScalarGridSpec(
            num_scalar_prefetch=0,
            grid=(num_splits, inner),
            in_specs=[
                pl.BlockSpec((tr, LANES), in_map),
                pl.BlockSpec((tr, LANES), in_map),
            ],
            out_specs=[
                pl.BlockSpec((1, 1, LANES), lambda c, i: (c, 0, 0)),
                pl.BlockSpec((1, 1, LANES), lambda c, i: (c, 0, 0)),
            ],
        ),
        compiler_params=pltpu.CompilerParams(
            dimension_semantics=("parallel", "arbitrary")),
    )(pred2d, target2d)

    total = jnp.sum(sum_out)
    # Per-lane count partials are exact small integers in f32; convert to
    # int32 before the final reduce so the count is exact for any image size.
    count = jnp.sum(cnt_out.astype(jnp.int32))
    return jnp.where(count < 10, jnp.float32(-1.0),
                     total / count.astype(jnp.float32))


def _inv_mae_ref(pred, target):
    pred = pred.reshape(-1).astype(jnp.float32)
    target = target.reshape(-1).astype(jnp.float32)
    valid = target > 0
    num = jnp.sum(valid)
    t_safe = jnp.where(valid, target, 1.0)
    p_safe = jnp.where(valid, pred, 1.0)
    err = jnp.where(valid, jnp.abs(1.0 / p_safe - 1.0 / t_safe), 0.0)
    return jnp.where(num < 10, jnp.float32(-1.0),
                     jnp.sum(err) / num.astype(jnp.float32))


if __name__ == "__main__":
    key = jax.random.PRNGKey(0)
    k1, k2 = jax.random.split(key)
    # NCHW inputs, like the PyTorch depth maps.
    pred = jax.random.uniform(k1, (2, 4, 16, 16), jnp.float32,
                              minval=0.1, maxval=5.0)
    # Mix of valid (>0) and invalid (<=0) pixels.
    target = jax.random.uniform(k2, (2, 4, 16, 16), jnp.float32,
                                minval=-1.0, maxval=5.0)

    out = inv_mae(pred, target)
    out = jax.block_until_ready(out)

    ref = _inv_mae_ref(pred, target)
    assert jnp.allclose(out, ref, rtol=1e-4, atol=1e-6), (out, ref)

    print("KERNEL_OK")
</pallas_src>

<mosaic_0001>
module attributes {stable_mosaic.version = 11 : i64} {
  func.func @_invmae_kernel(%arg0: i32, %arg1: i32, %arg2: memref<16x128xf32, #tpu.memory_space<vmem>>, %arg3: memref<16x128xf32, #tpu.memory_space<vmem>>, %arg4: memref<1x1x128xf32, #tpu.memory_space<vmem>>, %arg5: memref<1x1x128xf32, #tpu.memory_space<vmem>>) attributes {dimension_semantics = [#tpu.dimension_semantics<parallel>, #tpu.dimension_semantics<arbitrary>], iteration_bounds = array<i64: 2, 1>, scalar_prefetch = 0 : i64, scratch_operands = 0 : i64, tpu.core_type = #tpu.core_type<tc>, window_params = [{transform_indices = @transform_0, window_bounds = array<i64: 16, 128>}, {transform_indices = @transform_1, window_bounds = array<i64: 16, 128>}, {transform_indices = @transform_2, window_bounds = array<i64: 1, 1, 128>}, {transform_indices = @transform_3, window_bounds = array<i64: 1, 1, 128>}]} {
    %c0_i32 = arith.constant 0 : i32
    %0 = arith.cmpi eq, %arg1, %c0_i32 : i32
    %1 = arith.extui %0 : i1 to i32
    %c0_i32_0 = arith.constant 0 : i32
    %2 = arith.cmpi ne, %1, %c0_i32_0 : i32
    scf.if %2 {
      %cst_21 = arith.constant 0.000000e+00 : f32
      %39 = vector.broadcast %cst_21 : f32 to vector<1x1x128xf32>
      %c0_22 = arith.constant 0 : index
      %c0_23 = arith.constant 0 : index
      %c0_24 = arith.constant 0 : index
      %40 = vector.load %arg4[%c0_22, %c0_23, %c0_24] : memref<1x1x128xf32, #tpu.memory_space<vmem>>, vector<1x1x128xf32>
      tpu.vector_store %arg4[%c0_22, %c0_23, %c0_24], %39 {strides = array<i32>} : memref<1x1x128xf32, #tpu.memory_space<vmem>>, vector<1x1x128xf32>,
      %cst_25 = arith.constant 0.000000e+00 : f32
      %41 = vector.broadcast %cst_25 : f32 to vector<1x1x128xf32>
      %c0_26 = arith.constant 0 : index
      %c0_27 = arith.constant 0 : index
      %c0_28 = arith.constant 0 : index
      %42 = vector.load %arg5[%c0_26, %c0_27, %c0_28] : memref<1x1x128xf32, #tpu.memory_space<vmem>>, vector<1x1x128xf32>
      tpu.vector_store %arg5[%c0_26, %c0_27, %c0_28], %41 {strides = array<i32>} : memref<1x1x128xf32, #tpu.memory_space<vmem>>, vector<1x1x128xf32>,
    } else {
    }
    %c0 = arith.constant 0 : index
    %c0_1 = arith.constant 0 : index
    %3 = vector.load %arg3[%c0, %c0_1] : memref<16x128xf32, #tpu.memory_space<vmem>>, vector<16x128xf32>
    %c0_2 = arith.constant 0 : index
    %c0_3 = arith.constant 0 : index
    %4 = vector.load %arg2[%c0_2, %c0_3] : memref<16x128xf32, #tpu.memory_space<vmem>>, vector<16x128xf32>
    %cst = arith.constant 0.000000e+00 : f32
    %5 = vector.broadcast %cst : f32 to vector<16x128xf32>
    %6 = arith.cmpf ogt, %3, %5 : vector<16x128xf32>
    %c1_i32 = arith.constant 1 : i32
    %7 = arith.muli %arg0, %c1_i32 : i32
    %8 = arith.addi %7, %arg1 : i32
    %9 = tpu.iota {dimensions = array<i32: 0>} : vector<16x128xi32>
    %c16_i32 = arith.constant 16 : i32
    %10 = arith.muli %8, %c16_i32 : i32
    %11 = vector.broadcast %10 : i32 to vector<16x128xi32>
    %12 = arith.addi %9, %11 : vector<16x128xi32>
    %c16_i32_4 = arith.constant 16 : i32
    %13 = vector.broadcast %c16_i32_4 : i32 to vector<16x128xi32>
    %14 = arith.cmpi slt, %12, %13 : vector<16x128xi32>
    %15 = arith.andi %6, %14 : vector<16x128xi1>
    %16 = arith.mulf %4, %3 : vector<16x128xf32>
    %cst_5 = arith.constant 1.000000e+00 : f32
    %17 = vector.broadcast %cst_5 : f32 to vector<16x128xf32>
    %18 = arith.select %15, %16, %17 : vector<16x128xi1>, vector<16x128xf32>
    %19 = math.absf %18 : vector<16x128xf32>
    %20 = arith.subf %3, %4 : vector<16x128xf32>
    %21 = math.absf %20 : vector<16x128xf32>
    %22 = arith.divf %21, %19 : vector<16x128xf32>
    %cst_6 = arith.constant 0.000000e+00 : f32
    %23 = vector.broadcast %cst_6 : f32 to vector<16x128xf32>
    %24 = arith.select %15, %22, %23 : vector<16x128xi1>, vector<16x128xf32>
    %c0_7 = arith.constant 0 : index
    %c0_8 = arith.constant 0 : index
    %c0_9 = arith.constant 0 : index
    %25 = vector.load %arg4[%c0_7, %c0_8, %c0_9] : memref<1x1x128xf32, #tpu.memory_space<vmem>>, vector<1x1x128xf32>
    %cst_10 = arith.constant dense<0.000000e+00> : vector<128xf32>
    %26 = vector.multi_reduction <add>, %24, %cst_10 [0] : vector<16x128xf32> to vector<128xf32>
    %27 = vector.shape_cast %26 : vector<128xf32> to vector<1x128xf32>
    %28 = vector.shape_cast %27 : vector<1x128xf32> to vector<1x1x128xf32>
    %29 = arith.addf %25, %28 : vector<1x1x128xf32>
    %c0_11 = arith.constant 0 : index
    %c0_12 = arith.constant 0 : index
    %c0_13 = arith.constant 0 : index
    %30 = vector.load %arg4[%c0_11, %c0_12, %c0_13] : memref<1x1x128xf32, #tpu.memory_space<vmem>>, vector<1x1x128xf32>
    tpu.vector_store %arg4[%c0_11, %c0_12, %c0_13], %29 {strides = array<i32>} : memref<1x1x128xf32, #tpu.memory_space<vmem>>, vector<1x1x128xf32>,
    %c0_14 = arith.constant 0 : index
    %c0_15 = arith.constant 0 : index
    %c0_16 = arith.constant 0 : index
    %31 = vector.load %arg5[%c0_14, %c0_15, %c0_16] : memref<1x1x128xf32, #tpu.memory_space<vmem>>, vector<1x1x128xf32>
    %32 = arith.extui %15 : vector<16x128xi1> to vector<16x128xi32>
    %33 = arith.sitofp %32 : vector<16x128xi32> to vector<16x128xf32>
    %cst_17 = arith.constant dense<0.000000e+00> : vector<128xf32>
    %34 = vector.multi_reduction <add>, %33, %cst_17 [0] : vector<16x128xf32> to vector<128xf32>
    %35 = vector.shape_cast %34 : vector<128xf32> to vector<1x128xf32>
    %36 = vector.shape_cast %35 : vector<1x128xf32> to vector<1x1x128xf32>
    %37 = arith.addf %31, %36 : vector<1x1x128xf32>
    %c0_18 = arith.constant 0 : index
    %c0_19 = arith.constant 0 : index
    %c0_20 = arith.constant 0 : index
    %38 = vector.load %arg5[%c0_18, %c0_19, %c0_20] : memref<1x1x128xf32, #tpu.memory_space<vmem>>, vector<1x1x128xf32>
    tpu.vector_store %arg5[%c0_18, %c0_19, %c0_20], %37 {strides = array<i32>} : memref<1x1x128xf32, #tpu.memory_space<vmem>>, vector<1x1x128xf32>,
    return
  }
  func.func @transform_0(%arg0: i32, %arg1: i32) -> (i32, i32) {
    %c1_i32 = arith.constant 1 : i32
    %0 = arith.muli %arg0, %c1_i32 : i32
    %1 = arith.addi %0, %arg1 : i32
    %c0_i32 = arith.constant 0 : i32
    %2 = arith.minsi %1, %c0_i32 : i32
    %c0_i32_0 = arith.constant 0 : i32
    %c0_i32_1 = arith.constant 0 : i32
    return %2, %c0_i32_0 : i32, i32
  }
  func.func @transform_1(%arg0: i32, %arg1: i32) -> (i32, i32) {
    %c1_i32 = arith.constant 1 : i32
    %0 = arith.muli %arg0, %c1_i32 : i32
    %1 = arith.addi %0, %arg1 : i32
    %c0_i32 = arith.constant 0 : i32
    %2 = arith.minsi %1, %c0_i32 : i32
    %c0_i32_0 = arith.constant 0 : i32
    %c0_i32_1 = arith.constant 0 : i32
    return %2, %c0_i32_0 : i32, i32
  }
  func.func @transform_2(%arg0: i32, %arg1: i32) -> (i32, i32, i32) {
    %c0_i32 = arith.constant 0 : i32
    %c0_i32_0 = arith.constant 0 : i32
    %c0_i32_1 = arith.constant 0 : i32
    return %arg0, %c0_i32, %c0_i32_0 : i32, i32, i32
  }
  func.func @transform_3(%arg0: i32, %arg1: i32) -> (i32, i32, i32) {
    %c0_i32 = arith.constant 0 : i32
    %c0_i32_0 = arith.constant 0 : i32
    %c0_i32_1 = arith.constant 0 : i32
    return %arg0, %c0_i32, %c0_i32_0 : i32, i32, i32
  }
}

</mosaic_0001>

<llo_original>
// kernel: inv_mae.1
$region0: #{inv_mae.1}
  #allocation0 [shape = 'u32[]', space=smem, size = 0x4, offset = 0x4, fixed_abs, tag = 'smem constant byte address 0x4 - core index']
  #allocation1 [shape = 'u32[72,128]{1,0:T(1,128)}', space=vmem, size = 0x9000, scoped, tag = 'internal scratch']
  %s0 = inlined_call_operand.vmem [shape: f32[16,128], index: 0, kind: input, shape index: {}]
  %s1 = inlined_call_operand.vmem [shape: f32[16,128], index: 1, kind: input, shape index: {}]
  %s2 = inlined_call_operand.vmem [shape: f32[2,1,128], index: 2, kind: output, shape index: {0}]
  %s3 = inlined_call_operand.vmem [shape: f32[2,1,128], index: 3, kind: output, shape index: {1}]
  %4 = xla_tuple %s2, %s3
  %s5 = sld [smem:[#allocation0]]
  $region53: #{inv_mae.1} parent=0
    _
  %s7 = ssub.s32 1, %s5
  %s8 = scalar_select 0, %s7, %s5
  loop: start=0, step=1, limit=4
  $region2: #{inv_mae.1} parent=0 // loop_pre_header
    _
  $region3: #{inv_mae.1} parent=0 // loop_header
    %s10 = sphi 0, %s14
    %p11 = scmp.ge.s32.totalorder %s10, 4
    %s17 = sphi 0, %s29
    %s18 = sphi 0, %s25
    %s19 = sphi 0, %s17
    %s20 = sphi 0, %s18
    %s21 = sphi 0, %s19
    %s22 = sphi 0, %s20
    %s38 = sphi 0, %s40
    %s41 = sphi 0, %s38
    %s42 = sphi 0, %s41
    %s58 = sphi 0, %s42
    %s70 = sphi 0, %s72
    %s73 = sphi 0, %s70
    %s74 = sphi 0, %s73
    %s90 = sphi 0, %s74
    %s96 = sphi 0, %s98
    %s99 = sphi 0, %s96
    %s100 = sphi 0, %s99
    %s116 = sphi 0, %s100
    %s122 = sphi 0, %s124
    %s125 = sphi 0, %s122
    %s126 = sphi 0, %s125
    %s142 = sphi 0, %s126
  $region4: #{inv_mae.1} parent=0 // loop_header_branch
    %13 = sbr.rel (%p11) target = $region8
  $region5: #{inv_mae.1} parent=0 // loop_body
    %s15 = ssub.s32 %s10, 1
    %s16 = ssub.s32 %s10, 2
    %s23 = sadd.s32 1, %s18
    %p24 = scmp.ge.s32.totalorder %s23, 1
    %s25 = scalar_select %p24, 0, %s23
    %s26 = sadd.s32 1, %s17
    %s27 = scalar_select %p24, %s26, %s17
    %p28 = scmp.ge.s32.totalorder %s27, 2
    %s29 = scalar_select %p28, 0, %s27
    %s30 = sadd.s32 %s17, %s18
    %p31 = scmp.lt.s32.totalorder %s30, 0
    %s32 = scalar_select %p31, %s30, 0
    %s33 = sadd.s32 %s29, %s25
    %p34 = scmp.lt.s32.totalorder %s33, 0
    %s35 = scalar_select %p34, %s33, 0
    %s36 = ssub.s32 %s32, %s35
    %p37 = scmp.eq.s32.totalorder %s36, 0
    %s39 = sadd.s32 %s38, 1
    %s40 = scalar_select %p37, %s38, %s39
    %p43 = pneg %p37
    %p44 = scmp.eq.s32.totalorder %s10, 1
    %p45 = por %p43, %p44
    %p46 = scmp.ne.s32.totalorder %s38, %s41
    %p47 = scmp.eq.s32.totalorder %s10, 0
    %p48 = por %p46, %p47
    %p49 = scmp.ne.s32.totalorder %s38, %s41
    %p50 = scmp.eq.s32.totalorder %s15, 1
    %p51 = por %p49, %p50
    %p52 = scmp.ne.s32.totalorder %s41, %s42
    %p53 = scmp.eq.s32.totalorder %s15, 0
    %p54 = por %p52, %p53
    %p55 = scmp.ne.s32.totalorder %s41, %s42
    %p56 = scmp.eq.s32.totalorder %s16, 1
    %p57 = por %p55, %p56
    %p59 = scmp.ne.s32.totalorder %s42, %s58
    %p60 = scmp.eq.s32.totalorder %s16, 0
    %p61 = por %p59, %p60
    %s62 = sadd.s32 %s17, %s18
    %p63 = scmp.lt.s32.totalorder %s62, 0
    %s64 = scalar_select %p63, %s62, 0
    %s65 = sadd.s32 %s29, %s25
    %p66 = scmp.lt.s32.totalorder %s65, 0
    %s67 = scalar_select %p66, %s65, 0
    %s68 = ssub.s32 %s64, %s67
    %p69 = scmp.eq.s32.totalorder %s68, 0
    %s71 = sadd.s32 %s70, 1
    %s72 = scalar_select %p69, %s70, %s71
    %p75 = pneg %p69
    %p76 = scmp.eq.s32.totalorder %s10, 1
    %p77 = por %p75, %p76
    %p78 = scmp.ne.s32.totalorder %s70, %s73
    %p79 = scmp.eq.s32.totalorder %s10, 0
    %p80 = por %p78, %p79
    %p81 = scmp.ne.s32.totalorder %s70, %s73
    %p82 = scmp.eq.s32.totalorder %s15, 1
    %p83 = por %p81, %p82
    %p84 = scmp.ne.s32.totalorder %s73, %s74
    %p85 = scmp.eq.s32.totalorder %s15, 0
    %p86 = por %p84, %p85
    %p87 = scmp.ne.s32.totalorder %s73, %s74
    %p88 = scmp.eq.s32.totalorder %s16, 1
    %p89 = por %p87, %p88
    %p91 = scmp.ne.s32.totalorder %s74, %s90
    %p92 = scmp.eq.s32.totalorder %s16, 0
    %p93 = por %p91, %p92
    %s94 = ssub.s32 %s17, %s29
    %p95 = scmp.eq.s32.totalorder %s94, 0
    %s97 = sadd.s32 %s96, 1
    %s98 = scalar_select %p95, %s96, %s97
    %p101 = pneg %p95
    %p102 = scmp.eq.s32.totalorder %s10, 1
    %p103 = por %p101, %p102
    %p104 = scmp.ne.s32.totalorder %s96, %s99
    %p105 = scmp.eq.s32.totalorder %s10, 0
    %p106 = por %p104, %p105
    %p107 = scmp.ne.s32.totalorder %s96, %s99
    %p108 = scmp.eq.s32.totalorder %s15, 1
    %p109 = por %p107, %p108
    %p110 = scmp.ne.s32.totalorder %s99, %s100
    %p111 = scmp.eq.s32.totalorder %s15, 0
    %p112 = por %p110, %p111
    %p113 = scmp.ne.s32.totalorder %s99, %s100
    %p114 = scmp.eq.s32.totalorder %s16, 1
    %p115 = por %p113, %p114
    %p117 = scmp.ne.s32.totalorder %s100, %s116
    %p118 = scmp.eq.s32.totalorder %s16, 0
    %p119 = por %p117, %p118
    %s120 = ssub.s32 %s17, %s29
    %p121 = scmp.eq.s32.totalorder %s120, 0
    %s123 = sadd.s32 %s122, 1
    %s124 = scalar_select %p121, %s122, %s123
    %p127 = pneg %p121
    %p128 = scmp.eq.s32.totalorder %s10, 1
    %p129 = por %p127, %p128
    %p130 = scmp.ne.s32.totalorder %s122, %s125
    %p131 = scmp.eq.s32.totalorder %s10, 0
    %p132 = por %p130, %p131
    %p133 = scmp.ne.s32.totalorder %s122, %s125
    %p134 = scmp.eq.s32.totalorder %s15, 1
    %p135 = por %p133, %p134
    %p136 = scmp.ne.s32.totalorder %s125, %s126
    %p137 = scmp.eq.s32.totalorder %s15, 0
    %p138 = por %p136, %p137
    %p139 = scmp.ne.s32.totalorder %s125, %s126
    %p140 = scmp.eq.s32.totalorder %s16, 1
    %p141 = por %p139, %p140
    %p143 = scmp.ne.s32.totalorder %s126, %s142
    %p144 = scmp.eq.s32.totalorder %s16, 0
    %p145 = por %p143, %p144
    %p146 = scmp.le.s32.totalorder 1, %s10
    %p147 = scmp.lt.s32.totalorder %s10, 3
    %p148 = pnand %p146, %p147
    %p149 = pneg %p148
    // Predicated region
    $region9: #{inv_mae.1} parent=5 // pred_check
      _
    $region10: #{inv_mae.1} parent=5 // pred_check_branch
      %151 = sbr.rel (%p148) target = $region12
    $region11: #{inv_mae.1} parent=5 // pred_region
      %s152 = ssub.s32 %s10, 1
    $region12: #{inv_mae.1} parent=5 // pred_fallthru
      _
    %p153 = scmp.lt.s32.totalorder %s10, 2
    // Predicated region
    $region13: #{inv_mae.1} parent=5 // pred_check
      %p154 = pneg %p153
    $region14: #{inv_mae.1} parent=5 // pred_check_branch
      %156 = sbr.rel (%p154) target = $region16
    $region15: #{inv_mae.1} parent=5 // pred_region
      // Predicated region
      $region17: #{inv_mae.1} parent=15 // pred_check
        %p157 = pneg %p48
      $region18: #{inv_mae.1} parent=15 // pred_check_branch
        %159 = sbr.rel (%p157) target = $region20
      $region19: #{inv_mae.1} parent=15 // pred_region
        %s160 = sadd.s32 %s17, %s18
        %p161 = scmp.lt.s32.totalorder %s160, 0
        %s162 = scalar_select %p161, %s160, 0
        %s163 = smul.u32 2, %s162
        %p164 = scmp.lt.s32.totalorder %s163, 1
        %s165 = scalar_select %p164, %s163, 1
        %s166 = smul.addr %s165, 8
        %s167 = scalar_lea.vmem %s0, %s166
        %s168 = sadd.s32 %s17, %s18
        %p169 = scmp.lt.s32.totalorder %s168, 0
        %s170 = scalar_select %p169, %s168, 0
        %s171 = smul.u32 2, %s170
      $region20: #{inv_mae.1} parent=15 // pred_fallthru
        _
      // Predicated region
      $region21: #{inv_mae.1} parent=15 // pred_check
        %p172 = pneg %p80
      $region22: #{inv_mae.1} parent=15 // pred_check_branch
        %174 = sbr.rel (%p172) target = $region24
      $region23: #{inv_mae.1} parent=15 // pred_region
        %s175 = sadd.s32 %s17, %s18
        %p176 = scmp.lt.s32.totalorder %s175, 0
        %s177 = scalar_select %p176, %s175, 0
        %s178 = smul.u32 2, %s177
        %p179 = scmp.lt.s32.totalorder %s178, 1
        %s180 = scalar_select %p179, %s178, 1
        %s181 = smul.addr %s180, 8
        %s182 = scalar_lea.vmem %s1, %s181
        %s183 = sadd.s32 %s17, %s18
        %p184 = scmp.lt.s32.totalorder %s183, 0
        %s185 = scalar_select %p184, %s183, 0
        %s186 = smul.u32 2, %s185
      $region24: #{inv_mae.1} parent=15 // pred_fallthru
        _
    $region16: #{inv_mae.1} parent=5 // pred_fallthru
      _
    %p187 = scmp.le.s32.totalorder 1, %s10
    %p188 = scmp.lt.s32.totalorder %s10, 3
    %p189 = pnand %p187, %p188
    %p190 = pneg %p189
    // Predicated region
    $region25: #{inv_mae.1} parent=5 // pred_check
      _
    $region26: #{inv_mae.1} parent=5 // pred_check_branch
      %192 = sbr.rel (%p189) target = $region28
    $region27: #{inv_mae.1} parent=5 // pred_region
      %s193 = ssub.s32 %s10, 1
      %s194 = sadd.s32 %s19, %s20
      %p195 = scmp.lt.s32.totalorder %s194, 0
      %s196 = scalar_select %p195, %s194, 0
      %s197 = smul.u32 2, %s196
      %p198 = scmp.lt.s32.totalorder %s197, 1
      %s199 = scalar_select %p198, %s197, 1
      %s200 = smul.addr %s199, 8
      %s201 = scalar_lea.vmem %s0, %s200
      %p202 = pneg %p54
      %p203 = pneg %p51
      %s204 = sadd.s32 %s19, %s20
      %p205 = scmp.lt.s32.totalorder %s204, 0
      %s206 = scalar_select %p205, %s204, 0
      %s207 = smul.u32 2, %s206
      %p208 = scmp.lt.s32.totalorder %s207, 1
      %s209 = scalar_select %p208, %s207, 1
      %s210 = smul.addr %s209, 8
      %s211 = scalar_lea.vmem %s1, %s210
      %p212 = pneg %p86
      %p213 = pneg %p83
      %p214 = pneg %p112
      %p215 = pneg %p109
      %p216 = scmp.lt.s32.totalorder %s19, 1
      %s217 = scalar_select %p216, %s19, 1
      %s218 = scalar_lea.vmem %s2, %s217
      %p219 = pneg %p138
      %p220 = pneg %p135
      %p221 = scmp.lt.s32.totalorder %s19, 1
      %s222 = scalar_select %p221, %s19, 1
      %s223 = scalar_lea.vmem %s3, %s222
      %s224 = sadd.s32 %s19, %s20
      %p225 = scmp.lt.s32.totalorder %s224, 0
      %s226 = scalar_select %p225, %s224, 0
      %s227 = smul.u32 2, %s226
      %p228 = scmp.lt.s32.totalorder %s227, 1
      %s229 = scalar_select %p228, %s227, 1
      %s230 = smul.addr %s229, 8
      %s231 = scalar_lea.vmem %s0, %s230
      %s232 = sadd.s32 %s19, %s20
      %p233 = scmp.lt.s32.totalorder %s232, 0
      %s234 = scalar_select %p233, %s232, 0
      %s235 = smul.u32 2, %s234
      %s236 = sadd.s32 %s19, %s20
      %p237 = scmp.lt.s32.totalorder %s236, 0
      %s238 = scalar_select %p237, %s236, 0
      %s239 = smul.u32 2, %s238
      %p240 = scmp.lt.s32.totalorder %s239, 1
      %s241 = scalar_select %p240, %s239, 1
      %s242 = smul.addr %s241, 8
      %s243 = scalar_lea.vmem %s1, %s242
      %s244 = sadd.s32 %s19, %s20
      %p245 = scmp.lt.s32.totalorder %s244, 0
      %s246 = scalar_select %p245, %s244, 0
      %s247 = smul.u32 2, %s246
      %p248 = scmp.lt.s32.totalorder %s19, 1
      %s249 = scalar_select %p248, %s19, 1
      %s250 = scalar_lea.vmem %s2, %s249
      %p251 = scmp.lt.s32.totalorder %s19, 1
      %s252 = scalar_select %p251, %s19, 1
      %s253 = scalar_lea.vmem %s3, %s252
      %p254 = scmp.eq.s32.totalorder %s20, 0
      // Predicated region
      $region29: #{inv_mae.1} parent=27 // pred_check
        %p255 = pneg %p254
      $region30: #{inv_mae.1} parent=27 // pred_check_branch
        %257 = sbr.rel (%p255) target = $region32
      $region31: #{inv_mae.1} parent=27 // pred_region
        %258 = vst [vmem:[%s250] sm:$0x1] 0.0
        %259 = vst [vmem:[%s253] sm:$0x1] 0.0
      $region32: #{inv_mae.1} parent=27 // pred_fallthru
        _
      %v260 = vld [vmem:[%s243] sm:$0xff]
      %v261 = vld [vmem:[%s243 + $0x8] sm:$0xff]
      %v262 = vld [vmem:[%s231] sm:$0xff]
      %v263 = vld [vmem:[%s231 + $0x8] sm:$0xff]
      %vm264 = vcmp.gt.f32.partialorder %v260, 0.0
      %vm265 = vcmp.gt.f32.partialorder %v261, 0.0
      %s266 = sadd.s32 %s19, %s20
      %v267 = vlaneseq
      %v268 = vshrl.u32 %v267, 7
      %v269 = vadd.s32 %v268, 8
      %s270 = smul.u32 %s266, 16
      %v271 = vstv %s270
      %v272 = vadd.s32 %v268, %v271
      %v273 = vadd.s32 %v269, %v271
      %vm274 = vcmp.lt.s32.totalorder %v272, 16
      %vm275 = vcmp.lt.s32.totalorder %v273, 16
      %vm276 = vmand %vm264, %vm274
      %vm277 = vmand %vm265, %vm275
      %v278 = vmul.f32 %v262, %v260
      %v279 = vmul.f32 %v263, %v261
      %v280 = vsel %vm276, %v278, 1.0
      %v281 = vsel %vm277, %v279, 1.0
      %v282 = vand.u32 2147483647, %v280
      %v283 = vand.u32 2147483647, %v281
      %v284 = vsub.f32 %v260, %v262
      %v285 = vsub.f32 %v261, %v263
      %v286 = vand.u32 2147483647, %v284
      %v287 = vand.u32 2147483647, %v285
      %v288 = vrcp.pop %v282
      %v289 = vmul.f32 %v282, %v288
      %v290 = vsub.f32 1.0, %v289
      %v291 = vmul.f32 %v288, %v290
      %v292 = vadd.f32 %v288, %v291
      %vm293 = vweird.f32 %v282
      %vm294 = vweird.f32 %v288
      %vm295 = vmor %vm293, %vm294
      %v296 = vsel %vm295, %v288, %v292
      %v297 = vand.u32 2147483647, %v282
      %vm298 = vcmp.eq.f32.partialorder %v297, 8.507059e+37
      %v299 = vand.u32 %v282, 2147483648
      %v300 = vor.u32 1.1754944e-38, %v299
      %v301 = vsel %vm298, %v300, %v296
      %v302 = vmul.f32 %v286, %v301
      %v303 = vrcp.pop %v283
      %v304 = vmul.f32 %v283, %v303
      %v305 = vsub.f32 1.0, %v304
      %v306 = vmul.f32 %v303, %v305
      %v307 = vadd.f32 %v303, %v306
      %vm308 = vweird.f32 %v283
      %vm309 = vweird.f32 %v303
      %vm310 = vmor %vm308, %vm309
      %v311 = vsel %vm310, %v303, %v307
      %v312 = vand.u32 2147483647, %v283
      %vm313 = vcmp.eq.f32.partialorder %v312, 8.507059e+37
      %v314 = vand.u32 %v283, 2147483648
      %v315 = vor.u32 1.1754944e-38, %v314
      %v316 = vsel %vm313, %v315, %v311
      %v317 = vmul.f32 %v287, %v316
      %v318 = vsel %vm276, %v302, 0.0
      %v319 = vsel %vm277, %v317, 0.0
      %v320 = vld [vmem:[%s250] sm:$0x1]
      %v321 = vadd.f32 %v318, %v319
      %v322 = vrot.slane %v321, 4
      %v323 = vadd.f32 %v321, %v322
      %v324 = vrot.slane %v323, 2
      %v325 = vadd.f32 %v323, %v324
      %v326 = vrot.slane %v325, 1
      %v327 = vadd.f32 %v325, %v326
      %v328 = vadd.f32 %v320, %v327
      %329 = vst [vmem:[%s250] sm:$0x1] %v328
      %v330 = vld [vmem:[%s253] sm:$0x1]
      %v331 = vsel %vm276, 1, 0
      %v332 = vsel %vm277, 1, 0
      %v333 = vcvt.s32.f32 %v331
      %v334 = vcvt.s32.f32 %v332
      %v335 = vadd.f32 %v333, %v334
      %v336 = vrot.slane %v335, 4
      %v337 = vadd.f32 %v335, %v336
      %v338 = vrot.slane %v337, 2
      %v339 = vadd.f32 %v337, %v338
      %v340 = vrot.slane %v339, 1
      %v341 = vadd.f32 %v339, %v340
      %v342 = vadd.f32 %v330, %v341
      %343 = vst [vmem:[%s253] sm:$0x1] %v342
      %p344 = scmp.lt.s32.totalorder %s19, 1
      %s345 = scalar_select %p344, %s19, 1
      %s346 = scalar_lea.vmem %s2, %s345
      %p347 = scmp.lt.s32.totalorder %s19, 1
      %s348 = scalar_select %p347, %s19, 1
      %s349 = scalar_lea.vmem %s3, %s348
      // Predicated region
      $region33: #{inv_mae.1} parent=27 // pred_check
        %p350 = pneg %p109
      $region34: #{inv_mae.1} parent=27 // pred_check_branch
        %352 = sbr.rel (%p350) target = $region36
      $region35: #{inv_mae.1} parent=27 // pred_region
        _
      $region36: #{inv_mae.1} parent=27 // pred_fallthru
        _
      // Predicated region
      $region37: #{inv_mae.1} parent=27 // pred_check
        %p353 = pneg %p135
      $region38: #{inv_mae.1} parent=27 // pred_check_branch
        %355 = sbr.rel (%p353) target = $region40
      $region39: #{inv_mae.1} parent=27 // pred_region
        _
      $region40: #{inv_mae.1} parent=27 // pred_fallthru
        _
    $region28: #{inv_mae.1} parent=5 // pred_fallthru
      _
    %p356 = scmp.le.s32.totalorder 2, %s10
    // Predicated region
    $region41: #{inv_mae.1} parent=5 // pred_check
      %p357 = pneg %p356
    $region42: #{inv_mae.1} parent=5 // pred_check_branch
      %359 = sbr.rel (%p357) target = $region44
    $region43: #{inv_mae.1} parent=5 // pred_region
      %s360 = ssub.s32 %s10, 2
      // Predicated region
      $region45: #{inv_mae.1} parent=43 // pred_check
        %p361 = pneg %p115
      $region46: #{inv_mae.1} parent=43 // pred_check_branch
        %363 = sbr.rel (%p361) target = $region48
      $region47: #{inv_mae.1} parent=43 // pred_region
        %p364 = scmp.lt.s32.totalorder %s21, 1
        %s365 = scalar_select %p364, %s21, 1
        %s366 = scalar_lea.vmem %s2, %s365
      $region48: #{inv_mae.1} parent=43 // pred_fallthru
        _
      // Predicated region
      $region49: #{inv_mae.1} parent=43 // pred_check
        %p367 = pneg %p141
      $region50: #{inv_mae.1} parent=43 // pred_check_branch
        %369 = sbr.rel (%p367) target = $region52
      $region51: #{inv_mae.1} parent=43 // pred_region
        %p370 = scmp.lt.s32.totalorder %s21, 1
        %s371 = scalar_select %p370, %s21, 1
        %s372 = scalar_lea.vmem %s3, %s371
      $region52: #{inv_mae.1} parent=43 // pred_fallthru
        _
    $region44: #{inv_mae.1} parent=5 // pred_fallthru
      _
  $region6: #{inv_mae.1} parent=0 // loop_footer
    %s14 = sadd.s32 1, %s10
  $region7: #{inv_mae.1} parent=0 // loop_footer_branch
    %9 = sbr.rel target = $region3
  $region8: #{inv_mae.1} parent=0 // loop_exit
    _

</llo_original>
